<compile_context>
chip_gen: v6e
topology: v6e:2x2x1
jax: 0.10.0
libtpu: 0.0.40
codegen_flags: <defaults>
</compile_context>

<pallas_src>
import functools

import jax
import jax.numpy as jnp
from jax import lax
from jax.experimental import pallas as pl
from jax.experimental.pallas import tpu as pltpu


def _am_softmax_kernel(cos_ref, lbl_ref, v0_ref, v1_ref, psum_ref, *,
                       margin_type, s, lam, eps, gamma, total_rows, block_rows):
    """One batch tile: (TB, C) cos_theta + (TB, 1) int32 labels -> block sum."""
    x = cos_ref[...].astype(jnp.float32)          # (TB, C)
    labels = lbl_ref[...]                         # (TB, 1) int32
    tb, n_cls = x.shape

    # One-hot mask rebuilt in-VMEM (no HBM traffic, no argmax emulation).
    col = lax.broadcasted_iota(jnp.int32, (tb, n_cls), 1)
    one_hot = (col == labels).astype(jnp.float32)

    if margin_type == 'cos':
        # v0 = s * m  (per class); fold s into the margin.
        logits = s * x - v0_ref[...] * one_hot
    elif margin_type == 'arc':
        # cos(theta + m) identity; v0 = s*cos(m), v1 = s*sin(m).
        # (torch code applies m to ALL classes on the arc path; kept as-is.)
        sin_theta = jnp.sqrt(jnp.maximum(1.0 - x * x, 0.0))
        logits = v0_ref[...] * x - v1_ref[...] * sin_theta
    else:  # 'cross_entropy' (s == 1)
        logits = x

    # Stable log-sum-exp over the class axis.
    max_l = jnp.max(logits, axis=-1, keepdims=True)
    lse = jnp.log(jnp.sum(jnp.exp(logits - max_l), axis=-1, keepdims=True)) + max_l

    # Logit at the target class (reuses the one_hot mask already built).
    logit_at_label = jnp.sum(logits * one_hot, axis=-1, keepdims=True)

    if eps == 0.0:
        # one-hot target:  CE = lse - logit[label]
        per_sample = lse - logit_at_label
    else:
        # smoothed target (lam at label, eps elsewhere; sums to 1):
        #   CE = lse - (lam - eps) * logit[label] - eps * sum_c logits
        row_sum = jnp.sum(logits, axis=-1, keepdims=True)
        per_sample = lse - (lam - eps) * logit_at_label - eps * row_sum

    if gamma != 0.0:
        p = jnp.exp(-per_sample)
        w = 1.0 - p
        if float(gamma).is_integer():
            w = lax.integer_pow(w, int(gamma))
        else:
            w = w ** gamma
        per_sample = w * per_sample

    # Mask rows that are batch padding (tail block).
    row_ids = pl.program_id(0) * block_rows + lax.broadcasted_iota(
        jnp.int32, (tb, 1), 0)
    per_sample = jnp.where(row_ids < total_rows, per_sample, 0.0)

    # Lane-dense partial-sum slab (unmasked vst); wrapper reads [0, 0] of each.
    psum_ref[...] = jnp.full(psum_ref.shape, jnp.sum(per_sample),
                             dtype=jnp.float32)


def _choose_block_rows(batch, n_classes, itemsize, requested=None):
    """Pick a batch tile: big enough to pipeline well, small enough for VMEM."""
    align = max(8, 32 // max(1, itemsize))          # f32:8, bf16:16, int8:32
    cap = 1024 if requested is None else int(requested)
    budget = 4 * 1024 * 1024                        # bytes per input tile
    tb = min(cap, budget // max(1, n_classes * itemsize))
    tb = max(align, (tb // align) * align)
    b_pad = -(-batch // align) * align
    if b_pad <= tb:
        return b_pad, b_pad                         # single block
    b_pad = -(-batch // tb) * tb
    return tb, b_pad


def am_softmax_loss(cos_theta, target, *, margin_type='cos', num_classes=2,
                    label_smooth=False, smoothing=0.1, ratio=(1, 1),
                    gamma=0.0, m=0.5, s=30.0, t=1.0, block_rows=None):
    """JAX/Pallas equivalent of AMSoftmaxLoss.forward(cos_theta, one_hot_target)."""
    assert margin_type in ('cos', 'arc', 'cross_entropy')
    assert gamma >= 0 and m >= 0 and s > 0 and t >= 1
    batch, n_cls = cos_theta.shape
    assert n_cls == num_classes
    assert len(ratio) in (1, num_classes), "ratio must broadcast over classes"
    if label_smooth:
        # keeps argmax(smoothed target) == argmax(one-hot target)
        assert smoothing < (num_classes - 1) / num_classes

    m_full = jnp.broadcast_to(
        jnp.asarray([m / r for r in ratio], jnp.float32), (num_classes,))
    s_eff = float(s) if margin_type in ('cos', 'arc') else 1.0

    if margin_type == 'arc':
        v0 = (s_eff * jnp.cos(m_full))[None, :]
        v1 = (s_eff * jnp.sin(m_full))[None, :]
    elif margin_type == 'cos':
        v0 = (s_eff * m_full)[None, :]
        v1 = jnp.zeros((1, num_classes), jnp.float32)
    else:
        v0 = jnp.zeros((1, num_classes), jnp.float32)
        v1 = jnp.zeros((1, num_classes), jnp.float32)

    # Integer labels instead of the dense one-hot: halves kernel HBM reads and
    # deletes the in-kernel argmax emulation.
    labels = jnp.argmax(target, axis=1).astype(jnp.int32)[:, None]   # (B, 1)

    itemsize = jnp.dtype(cos_theta.dtype).itemsize
    tb, b_pad = _choose_block_rows(batch, num_classes, itemsize, block_rows)
    if b_pad != batch:
        cos_theta = jnp.pad(cos_theta, ((0, b_pad - batch), (0, 0)))
        labels = jnp.pad(labels, ((0, b_pad - batch), (0, 0)))
    num_blocks = b_pad // tb

    lam = 1.0 - float(smoothing) if label_smooth else 1.0
    eps = float(smoothing) / (num_classes - 1) if label_smooth else 0.0

    kernel = functools.partial(
        _am_softmax_kernel, margin_type=margin_type, s=s_eff,
        lam=lam, eps=eps, gamma=float(gamma),
        total_rows=batch, block_rows=tb)

    # TODO(synk): for very small num_classes (e.g. the default C=2) a
    # batch-on-lanes [C, B] layout would give full 128-lane occupancy; kept the
    # module's [B, C] layout here to avoid an extra HBM transpose pass.
    partial = pl.pallas_call(
        kernel,
        out_shape=jax.ShapeDtypeStruct((num_blocks * 8, 128), jnp.float32),
        grid_spec=pltpu.PrefetchScalarGridSpec(
            num_scalar_prefetch=0,
            grid=(num_blocks,),
            in_specs=[
                pl.BlockSpec((tb, num_classes), lambda i: (i, 0)),   # cos_theta
                pl.BlockSpec((tb, 1), lambda i: (i, 0)),             # labels
                pl.BlockSpec((1, num_classes), lambda i: (0, 0)),    # v0
                pl.BlockSpec((1, num_classes), lambda i: (0, 0)),    # v1
            ],
            out_specs=pl.BlockSpec((8, 128), lambda i: (i, 0)),
        ),
        compiler_params=pltpu.CompilerParams(
            dimension_semantics=("parallel",),
            vmem_limit_bytes=32 * 1024 * 1024),
    )(cos_theta, labels, v0, v1)

    block_sums = partial.reshape(num_blocks, 8, 128)[:, 0, 0]
    return jnp.sum(block_sums) / batch


# ---------------------------------------------------------------------------
# Pure-JAX mirror of the torch forward, used only for verification.
# ---------------------------------------------------------------------------
def _reference(cos_theta, target, *, margin_type='cos', num_classes=2,
               label_smooth=False, smoothing=0.1, ratio=(1, 1),
               gamma=0.0, m=0.5, s=30.0, t=1.0):
    m_vec = jnp.broadcast_to(
        jnp.asarray([m / r for r in ratio], jnp.float32), (num_classes,))
    s_eff = s if margin_type in ('cos', 'arc') else 1.0
    tgt = target.astype(jnp.float32)
    if label_smooth:
        tgt = jnp.where(target != 0, 1.0 - smoothing,
                        smoothing / (num_classes - 1))
    if margin_type in ('cos', 'arc'):
        fold = jnp.argmax(tgt, axis=1)
        one_hot = jax.nn.one_hot(fold, num_classes, dtype=jnp.float32)
        if margin_type == 'cos':
            output = cos_theta - m_vec[None, :] * one_hot
        else:
            theta = jnp.arccos(cos_theta)
            output = jnp.cos(theta + m_vec[None, :])
    else:
        output = cos_theta
    pred = jax.nn.log_softmax(s_eff * output, axis=-1)
    per = jnp.sum(-tgt * pred, axis=-1)
    if gamma == 0.0:
        return jnp.mean(per)
    p = jnp.exp(-per)
    return jnp.mean((1.0 - p) ** gamma * per)


if __name__ == "__main__":
    key = jax.random.PRNGKey(0)
    B, C = 8, 2                                      # module defaults: 2 classes

    k1, k2, k3, k4 = jax.random.split(key, 4)
    cos_theta = jax.random.uniform(k1, (B, C), minval=-1.0, maxval=1.0,
                                   dtype=jnp.float32)
    labels = jax.random.randint(k2, (B,), 0, C)
    target = jax.nn.one_hot(labels, C, dtype=jnp.float32)

    configs = [
        dict(margin_type='cos', num_classes=C, ratio=(1, 1), gamma=0.0,
             m=0.5, s=30.0),
        dict(margin_type='cos', num_classes=C, ratio=(1, 1), gamma=2.0,
             m=0.5, s=30.0, label_smooth=True, smoothing=0.1),
        dict(margin_type='arc', num_classes=C, ratio=(1, 1), gamma=0.0,
             m=0.5, s=30.0),
        dict(margin_type='cross_entropy', num_classes=C, ratio=(1, 1),
             gamma=0.0, m=0.5, s=30.0),
    ]
    for cfg in configs:
        loss = jax.block_until_ready(am_softmax_loss(cos_theta, target, **cfg))
        ref = _reference(cos_theta, target, **cfg)
        assert jnp.allclose(loss, ref, atol=1e-4, rtol=1e-4), (cfg, loss, ref)

    # Non-multiple-of-8 batch + 4 classes: exercises padding/masking and the
    # per-class margin vector.
    B2, C2 = 37, 4
    k5, k6 = jax.random.split(k3)
    ct2 = jax.random.uniform(k5, (B2, C2), minval=-1.0, maxval=1.0,
                             dtype=jnp.float32)
    tg2 = jax.nn.one_hot(jax.random.randint(k6, (B2,), 0, C2), C2,
                         dtype=jnp.float32)
    cfg2 = dict(margin_type='cos', num_classes=C2, ratio=(1, 2, 1, 2),
                gamma=0.0, m=0.5, s=30.0)
    loss2 = jax.block_until_ready(am_softmax_loss(ct2, tg2, **cfg2))
    ref2 = _reference(ct2, tg2, **cfg2)
    assert jnp.allclose(loss2, ref2, atol=1e-4, rtol=1e-4), (loss2, ref2)

    print("KERNEL_OK")
</pallas_src>

<mosaic_0001>
module attributes {stable_mosaic.version = 11 : i64} {
  func.func @_am_softmax_kernel(%arg0: i32, %arg1: memref<8x2xf32, #tpu.memory_space<vmem>>, %arg2: memref<8x1xi32, #tpu.memory_space<vmem>>, %arg3: memref<1x2xf32, #tpu.memory_space<vmem>>, %arg4: memref<1x2xf32, #tpu.memory_space<vmem>>, %arg5: memref<8x128xf32, #tpu.memory_space<vmem>>) attributes {dimension_semantics = [#tpu.dimension_semantics<parallel>], iteration_bounds = array<i64: 1>, scalar_prefetch = 0 : i64, scratch_operands = 0 : i64, tpu.core_type = #tpu.core_type<tc>, window_params = [{transform_indices = @transform_0, window_bounds = array<i64: 8, 2>}, {transform_indices = @transform_1, window_bounds = array<i64: 8, 1>}, {pipeline_mode = #tpu.pipeline_mode<synchronous>, transform_indices = @transform_2, window_bounds = array<i64: 1, 2>}, {pipeline_mode = #tpu.pipeline_mode<synchronous>, transform_indices = @transform_3, window_bounds = array<i64: 1, 2>}, {transform_indices = @transform_4, window_bounds = array<i64: 8, 128>}]} {
    %c0 = arith.constant 0 : index
    %c0_0 = arith.constant 0 : index
    %0 = vector.load %arg1[%c0, %c0_0] : memref<8x2xf32, #tpu.memory_space<vmem>>, vector<8x2xf32>
    %c0_1 = arith.constant 0 : index
    %c0_2 = arith.constant 0 : index
    %1 = vector.load %arg2[%c0_1, %c0_2] : memref<8x1xi32, #tpu.memory_space<vmem>>, vector<8x1xi32>
    %2 = tpu.iota {dimensions = array<i32: 1>} : vector<8x2xi32>
    %3 = vector.broadcast %1 : vector<8x1xi32> to vector<8x2xi32>
    %4 = arith.cmpi eq, %2, %3 : vector<8x2xi32>
    %5 = arith.extui %4 : vector<8x2xi1> to vector<8x2xi32>
    %6 = arith.sitofp %5 : vector<8x2xi32> to vector<8x2xf32>
    %cst = arith.constant 3.000000e+01 : f32
    %7 = vector.broadcast %cst : f32 to vector<8x2xf32>
    %8 = arith.mulf %7, %0 : vector<8x2xf32>
    %c0_3 = arith.constant 0 : index
    %c0_4 = arith.constant 0 : index
    %9 = vector.load %arg3[%c0_3, %c0_4] : memref<1x2xf32, #tpu.memory_space<vmem>>, vector<1x2xf32>
    %10 = vector.broadcast %9 : vector<1x2xf32> to vector<8x2xf32>
    %11 = arith.mulf %10, %6 : vector<8x2xf32>
    %12 = arith.subf %8, %11 : vector<8x2xf32>
    %cst_5 = arith.constant dense<0xFF800000> : vector<8xf32>
    %13 = vector.multi_reduction <maximumf>, %12, %cst_5 [1] : vector<8x2xf32> to vector<8xf32>
    %14 = vector.shape_cast %13 : vector<8xf32> to vector<8x1xf32>
    %15 = vector.broadcast %14 : vector<8x1xf32> to vector<8x2xf32>
    %16 = arith.subf %12, %15 : vector<8x2xf32>
    %17 = math.exp %16 : vector<8x2xf32>
    %cst_6 = arith.constant dense<0.000000e+00> : vector<8xf32>
    %18 = vector.multi_reduction <add>, %17, %cst_6 [1] : vector<8x2xf32> to vector<8xf32>
    %19 = vector.shape_cast %18 : vector<8xf32> to vector<8x1xf32>
    %20 = math.log %19 : vector<8x1xf32>
    %21 = arith.addf %20, %14 : vector<8x1xf32>
    %22 = arith.mulf %12, %6 : vector<8x2xf32>
    %cst_7 = arith.constant dense<0.000000e+00> : vector<8xf32>
    %23 = vector.multi_reduction <add>, %22, %cst_7 [1] : vector<8x2xf32> to vector<8xf32>
    %24 = vector.shape_cast %23 : vector<8xf32> to vector<8x1xf32>
    %25 = arith.subf %21, %24 : vector<8x1xf32>
    %c8_i32 = arith.constant 8 : i32
    %26 = arith.muli %arg0, %c8_i32 : i32
    %27 = tpu.iota {dimensions = array<i32: 0>} : vector<8x1xi32>
    %28 = vector.broadcast %26 : i32 to vector<8x1xi32>
    %29 = arith.addi %28, %27 : vector<8x1xi32>
    %c8_i32_8 = arith.constant 8 : i32
    %30 = vector.broadcast %c8_i32_8 : i32 to vector<8x1xi32>
    %31 = arith.cmpi slt, %29, %30 : vector<8x1xi32>
    %cst_9 = arith.constant 0.000000e+00 : f32
    %32 = vector.broadcast %cst_9 : f32 to vector<8x1xf32>
    %33 = arith.select %31, %25, %32 : vector<8x1xi1>, vector<8x1xf32>
    %34 = vector.shape_cast %33 : vector<8x1xf32> to vector<1x8x1xf32>
    %cst_10 = arith.constant dense<0.000000e+00> : vector<1xf32>
    %35 = vector.multi_reduction <add>, %34, %cst_10 [1, 2] : vector<1x8x1xf32> to vector<1xf32>
    %36 = vector.shape_cast %35 : vector<1xf32> to vector<1x1x1xf32>
    %37 = vector.extract %36[0, 0, 0] : f32 from vector<1x1x1xf32>
    %38 = vector.broadcast %37 : f32 to vector<8x128xf32>
    %c0_11 = arith.constant 0 : index
    %c0_12 = arith.constant 0 : index
    %39 = vector.load %arg5[%c0_11, %c0_12] : memref<8x128xf32, #tpu.memory_space<vmem>>, vector<8x128xf32>
    tpu.vector_store %arg5[%c0_11, %c0_12], %38 {strides = array<i32>} : memref<8x128xf32, #tpu.memory_space<vmem>>, vector<8x128xf32>,
    return
  }
  func.func @transform_0(%arg0: i32) -> (i32, i32) {
    %c0_i32 = arith.constant 0 : i32
    %c0_i32_0 = arith.constant 0 : i32
    return %arg0, %c0_i32 : i32, i32
  }
  func.func @transform_1(%arg0: i32) -> (i32, i32) {
    %c0_i32 = arith.constant 0 : i32
    %c0_i32_0 = arith.constant 0 : i32
    return %arg0, %c0_i32 : i32, i32
  }
  func.func @transform_2(%arg0: i32) -> (i32, i32) {
    %c0_i32 = arith.constant 0 : i32
    %c0_i32_0 = arith.constant 0 : i32
    %c0_i32_1 = arith.constant 0 : i32
    return %c0_i32, %c0_i32_0 : i32, i32
  }
  func.func @transform_3(%arg0: i32) -> (i32, i32) {
    %c0_i32 = arith.constant 0 : i32
    %c0_i32_0 = arith.constant 0 : i32
    %c0_i32_1 = arith.constant 0 : i32
    return %c0_i32, %c0_i32_0 : i32, i32
  }
  func.func @transform_4(%arg0: i32) -> (i32, i32) {
    %c0_i32 = arith.constant 0 : i32
    %c0_i32_0 = arith.constant 0 : i32
    return %arg0, %c0_i32 : i32, i32
  }
}

</mosaic_0001>

<llo_original>
// kernel: tpu_custom_call.1
$region0: #{tpu_custom_call.1}
  #allocation0 [shape = 'u32[]', space=smem, size = 0x4, offset = 0x4, fixed_abs, tag = 'smem constant byte address 0x4 - core index']
  #allocation1 [shape = 'u32[144,128]{1,0:T(1,128)}', space=vmem, size = 0x12000, scoped, tag = 'internal scratch']
  %s0 = inlined_call_operand.vmem [shape: f32[8,2], index: 0, kind: input, shape index: {}]
  %s1 = inlined_call_operand.vmem [shape: s32[8,1], index: 1, kind: input, shape index: {}]
  %s2 = inlined_call_operand.vmem [shape: f32[1,2], index: 2, kind: input, shape index: {}]
  %s3 = inlined_call_operand.vmem [shape: f32[1,2], index: 3, kind: input, shape index: {}]
  %s4 = inlined_call_operand.hbm [shape: f32[8,128], index: 4, kind: output, shape index: {}]
  %s5 = sld [smem:[#allocation0]]
  $region26: #{tpu_custom_call.1} parent=0
    _
  %s7 = ssub.s32 1, %s5
  %s8 = scalar_select 0, %s7, %s5
  $region1: #{tpu_custom_call.1} parent=0
    #allocation2 [shape = 'u8[4096]{0}', space=vmem, size = 0x1000, scoped, tag = 'output window, operand 0, single buffered']
    #allocation3 [shape = 's32[1]{0}', space=sflag, size = 0x4, scoped, tag = 'scoped memory for tpu_custom_call.1']
    %9 = vsyncpa [#allocation3], 0
    // Predicated region
    $region2: #{tpu_custom_call.1} parent=1 // pred_check
      _
    $region3: #{tpu_custom_call.1} parent=1 // pred_check_branch
      %11 = sbr.rel (0) target = $region5
    $region4: #{tpu_custom_call.1} parent=1 // pred_region
      _
    $region5: #{tpu_custom_call.1} parent=1 // pred_fallthru
      _
    // Predicated region
    $region6: #{tpu_custom_call.1} parent=1 // pred_check
      _
    $region7: #{tpu_custom_call.1} parent=1 // pred_check_branch
      %13 = sbr.rel (0) target = $region9
    $region8: #{tpu_custom_call.1} parent=1 // pred_region
      _
    $region9: #{tpu_custom_call.1} parent=1 // pred_fallthru
      _
    // Predicated region
    $region10: #{tpu_custom_call.1} parent=1 // pred_check
      _
    $region11: #{tpu_custom_call.1} parent=1 // pred_check_branch
      %15 = sbr.rel (0) target = $region13
    $region12: #{tpu_custom_call.1} parent=1 // pred_region
      _
    $region13: #{tpu_custom_call.1} parent=1 // pred_fallthru
      _
    // Predicated region
    $region14: #{tpu_custom_call.1} parent=1 // pred_check
      _
    $region15: #{tpu_custom_call.1} parent=1 // pred_check_branch
      %17 = sbr.rel (0) target = $region17
    $region16: #{tpu_custom_call.1} parent=1 // pred_region
      _
    $region17: #{tpu_custom_call.1} parent=1 // pred_fallthru
      _
    %v18 = vld [vmem:[%s0] sm:$0xff]
    %v19 = vld [vmem:[%s1] sm:$0xff]
    %v20 = vlaneseq
    %v21 = vand.u32 %v20, 127
    %22 = vset.pattern.permute.xlu0 0
    %23 = vperm.xlu0 %22, %v19
    %v24 = vpop.permute.xlu0 %23
    %vm25 = vcmp.eq.s32.totalorder %v21, %v24
    %v26 = vsel %vm25, 1, 0
    %v27 = vcvt.s32.f32 %v26
    %v28 = vmul.f32 %v18, 30.0
    %v29 = vld [vmem:[%s2] sm:$0x1]
    %v31 = vlaneseq
    %v32 = vshrl.u32 %v31, 7
    %v33 = vsub.s32 0, %v32
    %v34 = vrot.slane %v29, %v33
    %v36 = vmul.f32 %v34, %v27
    %v37 = vsub.f32 %v28, %v36
    %vm38 = vcmask 15360
    %v39 = vsel %vm38, %v37, -inf
    %40 = vmax.xlane.f32.xlu0 %v39
    %v41 = vpop.xlane.xlu0 %40
    %v42 = vsub.f32 %v37, %v41
    %v43 = vmul.f32 %v42, 1.442695
    %v44 = vpow.pop %v43
    %v45 = vsel %vm38, %v44, 0.0
    %46 = vadd.xlane.f32.xlu0 %v45
    %v47 = vpop.xlane.xlu0 %46
    %v48 = vlog2.pop %v47
    %v49 = vmul.f32 %v48, 0.6931472
    %v50 = vadd.f32 %v49, %v41
    %v51 = vmul.f32 %v37, %v27
    %v52 = vsel %vm38, %v51, 0.0
    %53 = vadd.xlane.f32.xlu0 %v52
    %v54 = vpop.xlane.xlu0 %53
    %v55 = vsub.f32 %v50, %v54
    %s56 = smul.u32 0, 8
    %v57 = vlaneseq
    %v58 = vshrl.u32 %v57, 7
    %v59 = vstv %s56
    %v60 = vadd.s32 %v59, %v58
    %vm61 = vcmp.lt.s32.totalorder %v60, 8
    %v62 = vsel %vm61, %v55, 0.0
    %vm63 = vcmask 7168
    %v64 = vsel %vm63, %v62, 0.0
    %65 = vadd.xlane.f32.xlu0 %v64
    %v66 = vpop.xlane.xlu0 %65
    %v67 = vrot.slane %v66, 4
    %v68 = vadd.f32 %v66, %v67
    %v69 = vrot.slane %v68, 2
    %v70 = vadd.f32 %v68, %v69
    %v71 = vrot.slane %v70, 1
    %v72 = vadd.f32 %v70, %v71
    %s73 = vtos %v72
    %v74 = vstv %s73
    %75 = vst [vmem:[#allocation2] sm:$0xff] %v74
    // Predicated region
    $region18: #{tpu_custom_call.1} parent=1 // pred_check
      _
    $region19: #{tpu_custom_call.1} parent=1 // pred_check_branch
      %77 = sbr.rel (0) target = $region21
    $region20: #{tpu_custom_call.1} parent=1 // pred_region
      %s79 = ssub.s32 128, 128
      %80 = vsyncadd [#allocation3], %s79
      %s82 = sshll.u32 [#allocation2], 4
      %s83 = int_to_ptr.vmem [resolvable:$true] %s82
      %85 = dma.vmem_to_hbm [thread:$0]  %s83, 128, %s4, [#allocation3]
    $region21: #{tpu_custom_call.1} parent=1 // pred_fallthru
      _
    // Predicated region
    $region22: #{tpu_custom_call.1} parent=1 // pred_check
      _
    $region23: #{tpu_custom_call.1} parent=1 // pred_check_branch
      %87 = sbr.rel (0) target = $region25
    $region24: #{tpu_custom_call.1} parent=1 // pred_region
      %88 = dma.done [#allocation3], 128
    $region25: #{tpu_custom_call.1} parent=1 // pred_fallthru
      _
    %89 = vsyncpa [#allocation3], 1

</llo_original>
